<compile_context>
chip_gen: v5e
topology: v5e:2x2
jax: 0.10.0
libtpu: 0.0.40
codegen_flags: <defaults>
</compile_context>

<pallas_src>
import functools

import jax
import jax.numpy as jnp
from jax.experimental import pallas as pl
from jax.experimental.pallas import tpu as pltpu


def _round_up(x, m):
    return (x + m - 1) // m * m


def _action_encoder_kernel(x_ref, w1_ref, b1_ref, w2_ref, b2_ref, o_ref):
    # x_ref : (TB, A_p)  bf16     w1_ref : (A_p, H_p) bf16    b1_ref : (1, H_p) f32
    # w2_ref: (H_p, H_p) bf16     b2_ref : (1, H_p)   f32     o_ref  : (TB, H_p) f32
    h = jnp.dot(x_ref[...], w1_ref[...], preferred_element_type=jnp.float32)
    h = jnp.maximum(h + b1_ref[...], 0.0)
    o = jnp.dot(h.astype(w2_ref.dtype), w2_ref[...],
                preferred_element_type=jnp.float32)
    o_ref[...] = jnp.maximum(o + b2_ref[...], 0.0).astype(o_ref.dtype)


def _pick_tile_b(B, A_p, H_p, desired, vmem_budget_bytes):
    """Largest batch tile (multiple of 8, <= desired) fitting a conservative VMEM budget."""
    tb = min(_round_up(desired, 8), _round_up(B, 8))

    def vmem_need(t):
        io = 2 * (t * A_p * 2 + t * H_p * 4)                      # double-buffered x / out
        wt = 2 * (A_p * H_p * 2 + H_p * H_p * 2 + 2 * H_p * 4)    # weights/biases (2 bufs)
        return io + wt

    while tb > 8 and vmem_need(tb) > vmem_budget_bytes:
        tb = _round_up(tb // 2, 8)
    return tb, vmem_need(tb)


@functools.partial(jax.jit, static_argnames=("tile_b",))
def action_encoder_forward(x, w1, b1, w2, b2, *, tile_b=256):
    """x: (B, action_dim) f32 -> (B, hidden_dim) f32."""
    B, A = x.shape
    H = w1.shape[1]

    # Pad feature dims: A to a sublane multiple of 8, H to a lane-dense multiple of 128.
    A_p = _round_up(A, 8)
    H_p = _round_up(H, 128)

    # Tile / VMEM budgeting (40 MiB budget leaves headroom on every generation).
    tb, vmem_need = _pick_tile_b(B, A_p, H_p, tile_b, 40 * 1024 * 1024)
    B_p = _round_up(B, tb)
    grid = (B_p // tb,)  # "parallel" axis -> megacore / 2-TC chips shard batch tiles

    # Zero-padding is exact: padded rows/cols of x, W1, W2, b1, b2 contribute 0,
    # and the padded output columns (== relu(0) == 0) are sliced off below.
    x_p = jnp.zeros((B_p, A_p), jnp.bfloat16).at[:B, :A].set(x.astype(jnp.bfloat16))
    w1_p = jnp.zeros((A_p, H_p), jnp.bfloat16).at[:A, :H].set(w1.astype(jnp.bfloat16))
    w2_p = jnp.zeros((H_p, H_p), jnp.bfloat16).at[:H, :H].set(w2.astype(jnp.bfloat16))
    b1_p = jnp.zeros((1, H_p), jnp.float32).at[0, :H].set(b1.astype(jnp.float32))
    b2_p = jnp.zeros((1, H_p), jnp.float32).at[0, :H].set(b2.astype(jnp.float32))

    cost = pl.CostEstimate(
        flops=2 * B_p * (A_p * H_p + H_p * H_p),
        transcendentals=0,
        bytes_accessed=(B_p * A_p * 2 + A_p * H_p * 2 + H_p * H_p * 2
                        + 2 * H_p * 4 + B_p * H_p * 4),
    )

    vmem_limit = int(min(max(vmem_need + 8 * 1024 * 1024, 32 * 1024 * 1024),
                         48 * 1024 * 1024))

    out = pl.pallas_call(
        _action_encoder_kernel,
        out_shape=jax.ShapeDtypeStruct((B_p, H_p), jnp.float32),
        grid_spec=pltpu.PrefetchScalarGridSpec(
            num_scalar_prefetch=0,
            grid=grid,
            in_specs=[
                pl.BlockSpec((tb, A_p), lambda i: (i, 0)),    # x tile (pipelined over batch)
                pl.BlockSpec((A_p, H_p), lambda i: (0, 0)),   # W1 (constant index -> DMA'd once)
                pl.BlockSpec((1, H_p), lambda i: (0, 0)),     # b1
                pl.BlockSpec((H_p, H_p), lambda i: (0, 0)),   # W2
                pl.BlockSpec((1, H_p), lambda i: (0, 0)),     # b2
            ],
            out_specs=pl.BlockSpec((tb, H_p), lambda i: (i, 0)),
        ),
        compiler_params=pltpu.CompilerParams(
            dimension_semantics=("parallel",),
            vmem_limit_bytes=vmem_limit,
        ),
        cost_estimate=cost,
    )(x_p, w1_p, b1_p, w2_p, b2_p)

    return out[:B, :H]


def init_params(key, action_dim, hidden_dim):
    """Init mimicking nn.Linear's uniform(-1/sqrt(fan_in), 1/sqrt(fan_in)).

    Weights stored as (in, out) for the kernel's x @ W convention.
    """
    k1, k2, k3, k4 = jax.random.split(key, 4)
    s1 = 1.0 / jnp.sqrt(action_dim)
    s2 = 1.0 / jnp.sqrt(hidden_dim)
    w1 = jax.random.uniform(k1, (action_dim, hidden_dim), jnp.float32, -s1, s1)
    b1 = jax.random.uniform(k2, (hidden_dim,), jnp.float32, -s1, s1)
    w2 = jax.random.uniform(k3, (hidden_dim, hidden_dim), jnp.float32, -s2, s2)
    b2 = jax.random.uniform(k4, (hidden_dim,), jnp.float32, -s2, s2)
    return w1, b1, w2, b2


def reference_forward(x, w1, b1, w2, b2):
    h = jnp.maximum(x @ w1 + b1, 0.0)
    return jnp.maximum(h @ w2 + b2, 0.0)


if __name__ == "__main__":
    key = jax.random.PRNGKey(0)
    kx, kp = jax.random.split(key)

    batch, action_dim, hidden_dim = 8, 4, 32
    x = jax.random.normal(kx, (batch, action_dim), jnp.float32)
    w1, b1, w2, b2 = init_params(kp, action_dim, hidden_dim)

    out = action_encoder_forward(x, w1, b1, w2, b2)
    out = jax.block_until_ready(out)

    ref = reference_forward(x, w1, b1, w2, b2)
    assert out.shape == (batch, hidden_dim)
    # bf16 matmul operands with f32 accumulation -> loosened tolerance vs f32 reference
    assert jnp.allclose(out, ref, atol=2e-2, rtol=2e-2), float(jnp.max(jnp.abs(out - ref)))

    print("KERNEL_OK")
</pallas_src>

<mosaic_0001>
module attributes {stable_mosaic.version = 11 : i64} {
  func.func @_action_encoder_kernel(%arg0: i32, %arg1: memref<8x8xbf16, #tpu.memory_space<vmem>>, %arg2: memref<8x128xbf16, #tpu.memory_space<vmem>>, %arg3: memref<1x128xf32, #tpu.memory_space<vmem>>, %arg4: memref<128x128xbf16, #tpu.memory_space<vmem>>, %arg5: memref<1x128xf32, #tpu.memory_space<vmem>>, %arg6: memref<8x128xf32, #tpu.memory_space<vmem>>) attributes {dimension_semantics = [#tpu.dimension_semantics<parallel>], iteration_bounds = array<i64: 1>, scalar_prefetch = 0 : i64, scratch_operands = 0 : i64, tpu.core_type = #tpu.core_type<tc>, window_params = [{transform_indices = @transform_0, window_bounds = array<i64: 8, 8>}, {pipeline_mode = #tpu.pipeline_mode<synchronous>, transform_indices = @transform_1, window_bounds = array<i64: 8, 128>}, {pipeline_mode = #tpu.pipeline_mode<synchronous>, transform_indices = @transform_2, window_bounds = array<i64: 1, 128>}, {pipeline_mode = #tpu.pipeline_mode<synchronous>, transform_indices = @transform_3, window_bounds = array<i64: 128, 128>}, {pipeline_mode = #tpu.pipeline_mode<synchronous>, transform_indices = @transform_4, window_bounds = array<i64: 1, 128>}, {transform_indices = @transform_5, window_bounds = array<i64: 8, 128>}]} {
    %c0 = arith.constant 0 : index
    %c0_0 = arith.constant 0 : index
    %0 = vector.load %arg1[%c0, %c0_0] : memref<8x8xbf16, #tpu.memory_space<vmem>>, vector<8x8xbf16>
    %c0_1 = arith.constant 0 : index
    %c0_2 = arith.constant 0 : index
    %1 = vector.load %arg2[%c0_1, %c0_2] : memref<8x128xbf16, #tpu.memory_space<vmem>>, vector<8x128xbf16>
    %cst = arith.constant dense<0.000000e+00> : vector<8x128xf32>
    %2 = tpu.matmul %0, %1, %cst {dimension_numbers = #tpu.dot_dimension_numbers<[1], [0], [0], [1], [0, 0, 1, 1], [], []>} : vector<8x8xbf16>, vector<8x128xbf16>, vector<8x128xf32> -> vector<8x128xf32>
    %c0_3 = arith.constant 0 : index
    %c0_4 = arith.constant 0 : index
    %3 = vector.load %arg3[%c0_3, %c0_4] : memref<1x128xf32, #tpu.memory_space<vmem>>, vector<1x128xf32>
    %4 = vector.broadcast %3 : vector<1x128xf32> to vector<8x128xf32>
    %5 = arith.addf %2, %4 : vector<8x128xf32>
    %cst_5 = arith.constant 0.000000e+00 : f32
    %6 = vector.broadcast %cst_5 : f32 to vector<8x128xf32>
    %7 = arith.maximumf %5, %6 : vector<8x128xf32>
    %8 = arith.truncf %7 : vector<8x128xf32> to vector<8x128xbf16>
    %c0_6 = arith.constant 0 : index
    %c0_7 = arith.constant 0 : index
    %9 = vector.load %arg4[%c0_6, %c0_7] : memref<128x128xbf16, #tpu.memory_space<vmem>>, vector<128x128xbf16>
    %cst_8 = arith.constant dense<0.000000e+00> : vector<8x128xf32>
    %10 = tpu.matmul %8, %9, %cst_8 {dimension_numbers = #tpu.dot_dimension_numbers<[1], [0], [0], [1], [0, 0, 1, 1], [], []>} : vector<8x128xbf16>, vector<128x128xbf16>, vector<8x128xf32> -> vector<8x128xf32>
    %c0_9 = arith.constant 0 : index
    %c0_10 = arith.constant 0 : index
    %11 = vector.load %arg5[%c0_9, %c0_10] : memref<1x128xf32, #tpu.memory_space<vmem>>, vector<1x128xf32>
    %12 = vector.broadcast %11 : vector<1x128xf32> to vector<8x128xf32>
    %13 = arith.addf %10, %12 : vector<8x128xf32>
    %cst_11 = arith.constant 0.000000e+00 : f32
    %14 = vector.broadcast %cst_11 : f32 to vector<8x128xf32>
    %15 = arith.maximumf %13, %14 : vector<8x128xf32>
    %c0_12 = arith.constant 0 : index
    %c0_13 = arith.constant 0 : index
    %16 = vector.load %arg6[%c0_12, %c0_13] : memref<8x128xf32, #tpu.memory_space<vmem>>, vector<8x128xf32>
    tpu.vector_store %arg6[%c0_12, %c0_13], %15 {strides = array<i32>} : memref<8x128xf32, #tpu.memory_space<vmem>>, vector<8x128xf32>,
    return
  }
  func.func @transform_0(%arg0: i32) -> (i32, i32) {
    %c0_i32 = arith.constant 0 : i32
    %c0_i32_0 = arith.constant 0 : i32
    return %arg0, %c0_i32 : i32, i32
  }
  func.func @transform_1(%arg0: i32) -> (i32, i32) {
    %c0_i32 = arith.constant 0 : i32
    %c0_i32_0 = arith.constant 0 : i32
    %c0_i32_1 = arith.constant 0 : i32
    return %c0_i32, %c0_i32_0 : i32, i32
  }
  func.func @transform_2(%arg0: i32) -> (i32, i32) {
    %c0_i32 = arith.constant 0 : i32
    %c0_i32_0 = arith.constant 0 : i32
    %c0_i32_1 = arith.constant 0 : i32
    return %c0_i32, %c0_i32_0 : i32, i32
  }
  func.func @transform_3(%arg0: i32) -> (i32, i32) {
    %c0_i32 = arith.constant 0 : i32
    %c0_i32_0 = arith.constant 0 : i32
    %c0_i32_1 = arith.constant 0 : i32
    return %c0_i32, %c0_i32_0 : i32, i32
  }
  func.func @transform_4(%arg0: i32) -> (i32, i32) {
    %c0_i32 = arith.constant 0 : i32
    %c0_i32_0 = arith.constant 0 : i32
    %c0_i32_1 = arith.constant 0 : i32
    return %c0_i32, %c0_i32_0 : i32, i32
  }
  func.func @transform_5(%arg0: i32) -> (i32, i32) {
    %c0_i32 = arith.constant 0 : i32
    %c0_i32_0 = arith.constant 0 : i32
    return %arg0, %c0_i32 : i32, i32
  }
}

</mosaic_0001>

<llo_original>
// kernel: action_encoder_forward.1
$region0: #{action_encoder_forward.1}
  #allocation0 [shape = 'u32[]', space=smem, size = 0x4, offset = 0x4, fixed_abs, tag = 'smem constant byte address 0x4 - core index']
  #allocation1 [shape = 'u32[72,128]{1,0:T(1,128)}', space=vmem, size = 0x9000, scoped, tag = 'internal scratch']
  %s0 = inlined_call_operand.vmem [shape: bf16[8,8], index: 0, kind: input, shape index: {}]
  %s1 = inlined_call_operand.vmem [shape: bf16[8,128], index: 1, kind: input, shape index: {}]
  %s2 = inlined_call_operand.vmem [shape: f32[1,128], index: 2, kind: input, shape index: {}]
  %s3 = inlined_call_operand.vmem [shape: bf16[128,128], index: 3, kind: input, shape index: {}]
  %s4 = inlined_call_operand.vmem [shape: f32[1,128], index: 4, kind: input, shape index: {}]
  %s5 = inlined_call_operand.hbm [shape: f32[8,128], index: 5, kind: output, shape index: {}]
  %s6 = sld [smem:[#allocation0]]
  $region30: #{action_encoder_forward.1} parent=0
    _
  %s8 = ssub.s32 1, %s6
  %s9 = scalar_select 0, %s8, %s6
  $region1: #{action_encoder_forward.1} parent=0
    #allocation2 [shape = 'u8[4096]{0}', space=vmem, size = 0x1000, scoped, tag = 'output window, operand 0, single buffered']
    #allocation3 [shape = 's32[1]{0}', space=sflag, size = 0x4, scoped, tag = 'scoped memory for action_encoder_forward.1']
    %10 = vsyncpa [#allocation3], 0
    // Predicated region
    $region2: #{action_encoder_forward.1} parent=1 // pred_check
      _
    $region3: #{action_encoder_forward.1} parent=1 // pred_check_branch
      %12 = sbr.rel (0) target = $region5
    $region4: #{action_encoder_forward.1} parent=1 // pred_region
      _
    $region5: #{action_encoder_forward.1} parent=1 // pred_fallthru
      _
    // Predicated region
    $region6: #{action_encoder_forward.1} parent=1 // pred_check
      _
    $region7: #{action_encoder_forward.1} parent=1 // pred_check_branch
      %14 = sbr.rel (0) target = $region9
    $region8: #{action_encoder_forward.1} parent=1 // pred_region
      _
    $region9: #{action_encoder_forward.1} parent=1 // pred_fallthru
      _
    // Predicated region
    $region10: #{action_encoder_forward.1} parent=1 // pred_check
      _
    $region11: #{action_encoder_forward.1} parent=1 // pred_check_branch
      %16 = sbr.rel (0) target = $region13
    $region12: #{action_encoder_forward.1} parent=1 // pred_region
      _
    $region13: #{action_encoder_forward.1} parent=1 // pred_fallthru
      _
    // Predicated region
    $region14: #{action_encoder_forward.1} parent=1 // pred_check
      _
    $region15: #{action_encoder_forward.1} parent=1 // pred_check_branch
      %18 = sbr.rel (0) target = $region17
    $region16: #{action_encoder_forward.1} parent=1 // pred_region
      _
    $region17: #{action_encoder_forward.1} parent=1 // pred_fallthru
      _
    // Predicated region
    $region18: #{action_encoder_forward.1} parent=1 // pred_check
      _
    $region19: #{action_encoder_forward.1} parent=1 // pred_check_branch
      %20 = sbr.rel (0) target = $region21
    $region20: #{action_encoder_forward.1} parent=1 // pred_region
      _
    $region21: #{action_encoder_forward.1} parent=1 // pred_fallthru
      _
    %v22 = vld [vmem:[%s0] sm:$0xf]
    %v23 = vld [vmem:[%s1] sm:$0xf]
    %v24 = vld [vmem:[%s2] sm:$0x1]
    %v26 = vperm.slane %v24, 0
    %vm28 = vcmask 64512
    %v30 = vsel %vm28, %v22, 0
    %vm32 = vcmask 1043456
    %v34 = vsel %vm32, %v23, 0
    %36 = vmatpush.bf16.msra.mxu0 0
    %37 = vmatpush.bf16.msra.mxu0 0
    %38 = vmatpush.bf16.msra.mxu0 0
    %39 = vmatpush.bf16.msra.mxu0 0
    %40 = vmatpush.bf16.msra.mxu0 0
    %41 = vmatpush.bf16.msra.mxu0 0
    %42 = vmatpush.bf16.msra.mxu0 0
    %43 = vmatpush.bf16.msra.mxu0 %v34
    %44 = vmatmul.bf16.gmra.mxu0 %v30
    %v45 = vpop.f32.mrf.mxu0
    %v46 = vadd.f32 %v26, %v45
    %v47 = vpop.f32.mrf.mxu0
    %48 = vdwg.mxu0
    %v49 = vmax.f32 %v46, 0.0
    %v50 = vpack.c.bf16 %v49, %v49
    %v51 = vld [vmem:[%s3] sm:$0xf]
    %v52 = vld [vmem:[%s3 + $0x4] sm:$0xf]
    %v53 = vld [vmem:[%s3 + $0x8] sm:$0xf]
    %v54 = vld [vmem:[%s3 + $0xc] sm:$0xf]
    %v55 = vld [vmem:[%s3 + $0x10] sm:$0xf]
    %v56 = vld [vmem:[%s3 + $0x14] sm:$0xf]
    %v57 = vld [vmem:[%s3 + $0x18] sm:$0xf]
    %v58 = vld [vmem:[%s3 + $0x1c] sm:$0xf]
    %v59 = vld [vmem:[%s3 + $0x20] sm:$0xf]
    %v60 = vld [vmem:[%s3 + $0x24] sm:$0xf]
    %v61 = vld [vmem:[%s3 + $0x28] sm:$0xf]
    %v62 = vld [vmem:[%s3 + $0x2c] sm:$0xf]
    %v63 = vld [vmem:[%s3 + $0x30] sm:$0xf]
    %v64 = vld [vmem:[%s3 + $0x34] sm:$0xf]
    %v65 = vld [vmem:[%s3 + $0x38] sm:$0xf]
    %v66 = vld [vmem:[%s3 + $0x3c] sm:$0xf]
    %v67 = vld [vmem:[%s4] sm:$0x1]
    %v69 = vperm.slane %v67, 0
    %v87 = vunpack.c.l.b16 %v51
    %v88 = vunpack.c.l.b16 %v52
    %v89 = vunpack.c.l.b16 %v53
    %v90 = vunpack.c.l.b16 %v54
    %v91 = vunpack.c.l.b16 %v55
    %v92 = vunpack.c.l.b16 %v56
    %v93 = vunpack.c.l.b16 %v57
    %v94 = vunpack.c.l.b16 %v58
    %v95 = vunpack.c.l.b16 %v59
    %v96 = vunpack.c.l.b16 %v60
    %v97 = vunpack.c.l.b16 %v61
    %v98 = vunpack.c.l.b16 %v62
    %v99 = vunpack.c.l.b16 %v63
    %v100 = vunpack.c.l.b16 %v64
    %v101 = vunpack.c.l.b16 %v65
    %v102 = vunpack.c.l.b16 %v66
    %v103 = vpack.c.b16 %v88, %v87
    %v104 = vpack.c.b16 %v90, %v89
    %v105 = vpack.c.b16 %v92, %v91
    %v106 = vpack.c.b16 %v94, %v93
    %v107 = vpack.c.b16 %v96, %v95
    %v108 = vpack.c.b16 %v98, %v97
    %v109 = vpack.c.b16 %v100, %v99
    %v110 = vpack.c.b16 %v102, %v101
    %119 = vmatpush.bf16.msra.mxu0 %v110
    %120 = vmatpush.bf16.msra.mxu0 %v109
    %121 = vmatpush.bf16.msra.mxu0 %v108
    %122 = vmatpush.bf16.msra.mxu0 %v107
    %123 = vmatpush.bf16.msra.mxu0 %v106
    %124 = vmatpush.bf16.msra.mxu0 %v105
    %125 = vmatpush.bf16.msra.mxu0 %v104
    %126 = vmatpush.bf16.msra.mxu0 %v103
    %127 = vmatmul.bf16.gmra.mxu0 %v50
    %v128 = vpop.f32.mrf.mxu0
    %v129 = vadd.f32 %v69, %v128
    %v130 = vpop.f32.mrf.mxu0
    %131 = vdwg.mxu0
    %v132 = vmax.f32 %v129, 0.0
    %133 = vst [vmem:[#allocation2] sm:$0xff] %v132
    // Predicated region
    $region22: #{action_encoder_forward.1} parent=1 // pred_check
      _
    $region23: #{action_encoder_forward.1} parent=1 // pred_check_branch
      %135 = sbr.rel (0) target = $region25
    $region24: #{action_encoder_forward.1} parent=1 // pred_region
      %137 = vsyncadd [#allocation3], 0
      %s139 = sshll.u32 [#allocation2], 4
      %s140 = int_to_ptr.vmem [resolvable:$true] %s139
      %s141 = sshll.u32 %s5, 4
      %s142 = int_to_ptr.hbm [resolvable:$true] %s141
      %144 = dma.vmem_to_hbm [thread:$0]  %s140, 128, %s142, [#allocation3]
    $region25: #{action_encoder_forward.1} parent=1 // pred_fallthru
      _
    // Predicated region
    $region26: #{action_encoder_forward.1} parent=1 // pred_check
      _
    $region27: #{action_encoder_forward.1} parent=1 // pred_check_branch
      %146 = sbr.rel (0) target = $region29
    $region28: #{action_encoder_forward.1} parent=1 // pred_region
      %148 = dma.done [#allocation3], 128
    $region29: #{action_encoder_forward.1} parent=1 // pred_fallthru
      _
    %149 = vsyncpa [#allocation3], 1

</llo_original>
